<compile_context>
chip_gen: v5e
topology: v5e:2x2
jax: 0.10.0
libtpu: 0.0.40
codegen_flags: <defaults>
</compile_context>

<pallas_src>
import math

import jax
import jax.numpy as jnp
from jax.experimental import pallas as pl
from jax.experimental.pallas import tpu as pltpu


def eca_kernel(w_ref, x_ref, o_ref):
    # w_ref: SMEM f32[3] -- Conv1d(1, 1, kernel_size=3, padding=1, bias=False)
    # x_ref: VMEM (1, C, HW) block (one batch element), lane-dense spatial axis
    # o_ref: VMEM (1, C, HW) block
    x = x_ref[0]                        # (C, HW), input dtype
    C, HW = x.shape

    # AdaptiveAvgPool2d(1): lane-axis reduce with f32 accumulation, * 1/HW.
    inv_hw = jnp.float32(1.0 / HW)
    y = jnp.sum(x, axis=-1, keepdims=True, dtype=jnp.float32) * inv_hw  # (C, 1)

    # k=3 channel conv with zero padding:
    #   conv[c] = w0 * y[c-1] + w1 * y[c] + w2 * y[c+1]
    # Channels live on the sublane axis; build shifted copies with zero edges.
    w0 = w_ref[0]
    w1 = w_ref[1]
    w2 = w_ref[2]
    if C >= 2:
        zero = jnp.zeros((1, 1), jnp.float32)
        y_prev = jnp.concatenate([zero, y[:-1, :]], axis=0)   # y[c-1], 0 at c=0
        y_next = jnp.concatenate([y[1:, :], zero], axis=0)    # y[c+1], 0 at c=C-1
        conv = w0 * y_prev + w1 * y + w2 * y_next              # (C, 1)
    else:
        conv = w1 * y                                          # both neighbors padded

    # Sigmoid gate (f32), broadcast across lanes, scale in the input dtype.
    gate = jax.nn.sigmoid(conv)                                # (C, 1), f32
    o_ref[0] = (x * gate.astype(x.dtype)).astype(o_ref.dtype)


def eca_forward(x, w):
    """x: (B, C, H, W); w: (3,) conv1d kernel. Returns (B, C, H, W)."""
    B, C, H, W = x.shape
    HW = H * W
    x2 = x.reshape(B, C, HW)                       # lane-dense spatial axis
    itemsize = jnp.dtype(x.dtype).itemsize

    # VMEM budget: input + output blocks are each double-buffered (~4x block).
    block_bytes = C * HW * itemsize
    needed = 4 * block_bytes + (2 << 20)
    vmem_limit = int(min(max(needed, 32 << 20), 100 << 20))
    # TODO(synk): for feature maps whose (C, H*W) block exceeds VMEM (v7x 64 MiB
    # physical / v5e 16 MiB scoped) or for B == 1 on v7x's two TensorCores,
    # switch to a two-pass structure: pool+gate kernel over (B, C), then a
    # spatially tiled scale kernel with a second "parallel" grid axis.

    cost = pl.CostEstimate(
        flops=2 * B * C * HW,              # pool reduce + broadcast multiply
        transcendentals=B * C,             # sigmoid
        bytes_accessed=2 * B * C * HW * itemsize + 3 * 4,
    )

    out2 = pl.pallas_call(
        eca_kernel,
        out_shape=jax.ShapeDtypeStruct((B, C, HW), x.dtype),
        grid=(B,),
        in_specs=[
            pl.BlockSpec(memory_space=pltpu.MemorySpace.SMEM),   # conv weights
            pl.BlockSpec((1, C, HW), lambda b: (b, 0, 0)),       # x, one batch / step
        ],
        out_specs=pl.BlockSpec((1, C, HW), lambda b: (b, 0, 0)),
        compiler_params=pltpu.CompilerParams(
            dimension_semantics=("parallel",),
            vmem_limit_bytes=vmem_limit,
        ),
        cost_estimate=cost,
    )(w.astype(jnp.float32), x2)
    return out2.reshape(B, C, H, W)


def eca_reference(x, w):
    """Pure-JAX reference reproducing the PyTorch forward."""
    y = jnp.mean(x.astype(jnp.float32), axis=(2, 3))            # (B, C)
    yp = jnp.pad(y, ((0, 0), (1, 1)))                           # zero pad channels
    conv = w[0] * yp[:, :-2] + w[1] * yp[:, 1:-1] + w[2] * yp[:, 2:]
    s = jax.nn.sigmoid(conv)                                    # (B, C)
    return (x.astype(jnp.float32) * s[:, :, None, None]).astype(x.dtype)


if __name__ == "__main__":
    key = jax.random.PRNGKey(0)
    kx, kw = jax.random.split(key)

    B, C, H, W = 2, 4, 16, 16
    x = jax.random.normal(kx, (B, C, H, W), dtype=jnp.float32)

    # Deterministic Conv1d(1, 1, 3, bias=False) weight init, matching PyTorch's
    # default kaiming-uniform bound 1/sqrt(fan_in) with fan_in = 1 * 3.
    bound = 1.0 / math.sqrt(3.0)
    w = jax.random.uniform(kw, (3,), dtype=jnp.float32, minval=-bound, maxval=bound)

    out = eca_forward(x, w)
    out = jax.block_until_ready(out)

    ref = eca_reference(x, w)
    assert out.shape == x.shape and out.dtype == x.dtype
    assert jnp.allclose(out, ref, atol=1e-5, rtol=1e-5), "mismatch vs reference"

    print("KERNEL_OK")
</pallas_src>

<mosaic_0001>
module attributes {stable_mosaic.version = 11 : i64} {
  func.func @eca_kernel(%arg0: i32, %arg1: memref<3xf32, #tpu.memory_space<smem>>, %arg2: memref<1x4x256xf32, #tpu.memory_space<vmem>>, %arg3: memref<1x4x256xf32, #tpu.memory_space<vmem>>) attributes {dimension_semantics = [#tpu.dimension_semantics<parallel>], iteration_bounds = array<i64: 2>, scalar_prefetch = 0 : i64, scratch_operands = 0 : i64, tpu.core_type = #tpu.core_type<tc>, window_params = [{transform_indices = @transform_0, window_bounds = array<i64: 3>}, {transform_indices = @transform_1, window_bounds = array<i64: 1, 4, 256>}, {transform_indices = @transform_2, window_bounds = array<i64: 1, 4, 256>}]} {
    %c0 = arith.constant 0 : index
    %c0_0 = arith.constant 0 : index
    %c0_1 = arith.constant 0 : index
    %0 = vector.load %arg2[%c0, %c0_0, %c0_1] : memref<1x4x256xf32, #tpu.memory_space<vmem>>, vector<1x4x256xf32>
    %1 = vector.shape_cast %0 : vector<1x4x256xf32> to vector<4x256xf32>
    %cst = arith.constant dense<0.000000e+00> : vector<4xf32>
    %2 = vector.multi_reduction <add>, %1, %cst [1] : vector<4x256xf32> to vector<4xf32>
    %3 = vector.shape_cast %2 : vector<4xf32> to vector<4x1xf32>
    %cst_2 = arith.constant 3.906250e-03 : f32
    %4 = vector.broadcast %cst_2 : f32 to vector<4x1xf32>
    %5 = arith.mulf %3, %4 : vector<4x1xf32>
    %c0_3 = arith.constant 0 : index
    %6 = memref.load %arg1[%c0_3] : memref<3xf32, #tpu.memory_space<smem>>
    %c1 = arith.constant 1 : index
    %7 = memref.load %arg1[%c1] : memref<3xf32, #tpu.memory_space<smem>>
    %c2 = arith.constant 2 : index
    %8 = memref.load %arg1[%c2] : memref<3xf32, #tpu.memory_space<smem>>
    %cst_4 = arith.constant 0.000000e+00 : f32
    %9 = vector.broadcast %cst_4 : f32 to vector<1x1xf32>
    %10 = vector.extract_strided_slice %5 {offsets = [0, 0], sizes = [3, 1], strides = [1, 1]} : vector<4x1xf32> to vector<3x1xf32>
    %11 = tpu.concatenate %9, %10 in 0 : vector<1x1xf32>, vector<3x1xf32> -> vector<4x1xf32>
    %12 = vector.extract_strided_slice %5 {offsets = [1, 0], sizes = [3, 1], strides = [1, 1]} : vector<4x1xf32> to vector<3x1xf32>
    %13 = tpu.concatenate %12, %9 in 0 : vector<3x1xf32>, vector<1x1xf32> -> vector<4x1xf32>
    %14 = vector.broadcast %6 : f32 to vector<4x1xf32>
    %15 = arith.mulf %14, %11 : vector<4x1xf32>
    %16 = vector.broadcast %7 : f32 to vector<4x1xf32>
    %17 = arith.mulf %16, %5 : vector<4x1xf32>
    %18 = arith.addf %15, %17 : vector<4x1xf32>
    %19 = vector.broadcast %8 : f32 to vector<4x1xf32>
    %20 = arith.mulf %19, %13 : vector<4x1xf32>
    %21 = arith.addf %18, %20 : vector<4x1xf32>
    %22 = arith.negf %21 : vector<4x1xf32>
    %23 = math.exp %22 : vector<4x1xf32>
    %cst_5 = arith.constant 1.000000e+00 : f32
    %24 = vector.broadcast %cst_5 : f32 to vector<4x1xf32>
    %25 = arith.addf %24, %23 : vector<4x1xf32>
    %26 = arith.divf %24, %25 : vector<4x1xf32>
    %27 = vector.broadcast %26 : vector<4x1xf32> to vector<4x256xf32>
    %28 = arith.mulf %1, %27 : vector<4x256xf32>
    %c0_6 = arith.constant 0 : index
    %c0_7 = arith.constant 0 : index
    %c0_8 = arith.constant 0 : index
    %29 = vector.load %arg3[%c0_6, %c0_7, %c0_8] : memref<1x4x256xf32, #tpu.memory_space<vmem>>, vector<1x4x256xf32>
    %30 = vector.shape_cast %29 : vector<1x4x256xf32> to vector<4x256xf32>
    %31 = vector.shape_cast %28 : vector<4x256xf32> to vector<1x4x256xf32>
    tpu.vector_store %arg3[%c0_6, %c0_7, %c0_8], %31 {strides = array<i32>} : memref<1x4x256xf32, #tpu.memory_space<vmem>>, vector<1x4x256xf32>,
    return
  }
  func.func @transform_0(%arg0: i32) -> i32 {
    %c0_i32 = arith.constant 0 : i32
    %c0_i32_0 = arith.constant 0 : i32
    return %c0_i32 : i32
  }
  func.func @transform_1(%arg0: i32) -> (i32, i32, i32) {
    %c0_i32 = arith.constant 0 : i32
    %c0_i32_0 = arith.constant 0 : i32
    %c0_i32_1 = arith.constant 0 : i32
    return %arg0, %c0_i32, %c0_i32_0 : i32, i32, i32
  }
  func.func @transform_2(%arg0: i32) -> (i32, i32, i32) {
    %c0_i32 = arith.constant 0 : i32
    %c0_i32_0 = arith.constant 0 : i32
    %c0_i32_1 = arith.constant 0 : i32
    return %arg0, %c0_i32, %c0_i32_0 : i32, i32, i32
  }
}

</mosaic_0001>

<llo_original>
// kernel: tpu_custom_call.1
$region0: #{tpu_custom_call.1}
  #allocation0 [shape = 'u32[]', space=smem, size = 0x4, offset = 0x4, fixed_abs, tag = 'smem constant byte address 0x4 - core index']
  #allocation1 [shape = 'u32[72,128]{1,0:T(1,128)}', space=vmem, size = 0x9000, scoped, tag = 'internal scratch']
  %s0 = inlined_call_operand.hbm [shape: f32[3], index: 0, kind: input, shape index: {}]
  %s1 = inlined_call_operand.hbm [shape: f32[2,4,256], index: 1, kind: input, shape index: {}]
  %s2 = inlined_call_operand.hbm [shape: f32[2,4,256], index: 2, kind: output, shape index: {}]
  %s3 = sld [smem:[#allocation0]]
  $region49: #{tpu_custom_call.1} parent=0
    _
  %s5 = ssub.s32 1, %s3
  %s6 = scalar_select 0, %s5, %s3
  $region1: #{tpu_custom_call.1} parent=0
    #allocation2 [shape = 'u8[512]{0}', space=smem, size = 0x200, scoped, tag = 'input window, operand 0, single buffered']
    #allocation3 [shape = 's32[2]{0}', space=sflag, size = 0x8, scoped, tag = 'scoped memory for tpu_custom_call.1']
    #allocation4 [shape = 's32[2]{0}', space=sflag, size = 0x8, scoped, tag = 'scoped memory for tpu_custom_call.1']
    #allocation5 [shape = 's32[2]{0}', space=sflag, size = 0x8, scoped, tag = 'scoped memory for tpu_custom_call.1']
    #allocation6 [shape = 'u8[8192]{0}', space=vmem, size = 0x2000, scoped, tag = 'input window, operand 1']
    #allocation7 [shape = 'u8[8192]{0}', space=vmem, size = 0x2000, scoped, tag = 'output window, operand 0']
    %7 = vsyncpa [#allocation5], 0
    %8 = vsyncpa [#allocation3], 0
    %s9 = scalar_lea.sflag [#allocation3], 1
    %10 = vsyncpa %s9, 0
    %11 = vsyncpa [#allocation4], 0
    %s12 = scalar_lea.sflag [#allocation4], 1
    %13 = vsyncpa %s12, 0
    loop: start=0, step=1, limit=4
    $region2: #{tpu_custom_call.1} parent=1 // loop_pre_header
      _
    $region3: #{tpu_custom_call.1} parent=1 // loop_header
      %s15 = sphi 0, %s19
      %p16 = scmp.ge.s32.totalorder %s15, 4
      %s23 = sphi 0, %s23
      %s25 = sphi 0, %s23
      %s26 = sphi 0, %s25
      %s40 = sphi 0, %s26
      %s46 = sphi 0, %s48
      %s49 = sphi 0, %s46
      %s50 = sphi 0, %s49
      %s66 = sphi 0, %s50
      %s72 = sphi 0, %s74
      %s75 = sphi 0, %s72
      %s76 = sphi 0, %s75
      %s92 = sphi 0, %s76
    $region4: #{tpu_custom_call.1} parent=1 // loop_header_branch
      %18 = sbr.rel (%p16) target = $region8
    $region5: #{tpu_custom_call.1} parent=1 // loop_body
      %s20 = ssub.s32 %s15, 1
      %s21 = ssub.s32 %s15, 2
      %s22 = sadd.s32 %s15, 1
      %s24 = sadd.s32 %s23, 1
      %p27 = scmp.eq.s32.totalorder %s15, 1
      %p28 = scmp.ne.s32.totalorder %s23, %s25
      %p29 = scmp.eq.s32.totalorder %s15, 0
      %p30 = por %p28, %p29
      %p31 = scmp.ne.s32.totalorder %s23, %s25
      %p32 = scmp.eq.s32.totalorder %s20, 1
      %p33 = por %p31, %p32
      %p34 = scmp.ne.s32.totalorder %s25, %s26
      %p35 = scmp.eq.s32.totalorder %s20, 0
      %p36 = por %p34, %p35
      %p37 = scmp.ne.s32.totalorder %s25, %s26
      %p38 = scmp.eq.s32.totalorder %s21, 1
      %p39 = por %p37, %p38
      %p41 = scmp.ne.s32.totalorder %s26, %s40
      %p42 = scmp.eq.s32.totalorder %s21, 0
      %p43 = por %p41, %p42
      %s44 = ssub.s32 %s15, %s22
      %p45 = scmp.eq.s32.totalorder %s44, 0
      %s47 = sadd.s32 %s46, 1
      %s48 = scalar_select %p45, %s46, %s47
      %p51 = pneg %p45
      %p52 = scmp.eq.s32.totalorder %s15, 1
      %p53 = por %p51, %p52
      %p54 = scmp.ne.s32.totalorder %s46, %s49
      %p55 = scmp.eq.s32.totalorder %s15, 0
      %p56 = por %p54, %p55
      %p57 = scmp.ne.s32.totalorder %s46, %s49
      %p58 = scmp.eq.s32.totalorder %s20, 1
      %p59 = por %p57, %p58
      %p60 = scmp.ne.s32.totalorder %s49, %s50
      %p61 = scmp.eq.s32.totalorder %s20, 0
      %p62 = por %p60, %p61
      %p63 = scmp.ne.s32.totalorder %s49, %s50
      %p64 = scmp.eq.s32.totalorder %s21, 1
      %p65 = por %p63, %p64
      %p67 = scmp.ne.s32.totalorder %s50, %s66
      %p68 = scmp.eq.s32.totalorder %s21, 0
      %p69 = por %p67, %p68
      %s70 = ssub.s32 %s15, %s22
      %p71 = scmp.eq.s32.totalorder %s70, 0
      %s73 = sadd.s32 %s72, 1
      %s74 = scalar_select %p71, %s72, %s73
      %p77 = pneg %p71
      %p78 = scmp.eq.s32.totalorder %s15, 1
      %p79 = por %p77, %p78
      %p80 = scmp.ne.s32.totalorder %s72, %s75
      %p81 = scmp.eq.s32.totalorder %s15, 0
      %p82 = por %p80, %p81
      %p83 = scmp.ne.s32.totalorder %s72, %s75
      %p84 = scmp.eq.s32.totalorder %s20, 1
      %p85 = por %p83, %p84
      %p86 = scmp.ne.s32.totalorder %s75, %s76
      %p87 = scmp.eq.s32.totalorder %s20, 0
      %p88 = por %p86, %p87
      %p89 = scmp.ne.s32.totalorder %s75, %s76
      %p90 = scmp.eq.s32.totalorder %s21, 1
      %p91 = por %p89, %p90
      %p93 = scmp.ne.s32.totalorder %s76, %s92
      %p94 = scmp.eq.s32.totalorder %s21, 0
      %p95 = por %p93, %p94
      %p96 = scmp.le.s32.totalorder 1, %s15
      %p97 = scmp.lt.s32.totalorder %s15, 3
      %p98 = pnand %p96, %p97
      %p99 = pneg %p98
      // Predicated region
      $region9: #{tpu_custom_call.1} parent=5 // pred_check
        _
      $region10: #{tpu_custom_call.1} parent=5 // pred_check_branch
        %101 = sbr.rel (%p98) target = $region12
      $region11: #{tpu_custom_call.1} parent=5 // pred_region
        %s102 = ssub.s32 %s15, 1
        // Predicated region
        $region13: #{tpu_custom_call.1} parent=11 // pred_check
          %p103 = pneg %p36
        $region14: #{tpu_custom_call.1} parent=11 // pred_check_branch
          %105 = sbr.rel (%p103) target = $region16
        $region15: #{tpu_custom_call.1} parent=11 // pred_region
          %107 = vsyncadd [#allocation5], 0
          %s109 = sshll.u32 %s0, 4
          %s110 = int_to_ptr.hbm [resolvable:$true] %s109
          %112 = dma.hbm_to_smem %s110, 16, [#allocation2], [#allocation5]
        $region16: #{tpu_custom_call.1} parent=11 // pred_fallthru
          _
      $region12: #{tpu_custom_call.1} parent=5 // pred_fallthru
        _
      %p113 = scmp.lt.s32.totalorder %s15, 2
      // Predicated region
      $region17: #{tpu_custom_call.1} parent=5 // pred_check
        %p114 = pneg %p113
      $region18: #{tpu_custom_call.1} parent=5 // pred_check_branch
        %116 = sbr.rel (%p114) target = $region20
      $region19: #{tpu_custom_call.1} parent=5 // pred_region
        // Predicated region
        $region21: #{tpu_custom_call.1} parent=19 // pred_check
          %p117 = pneg %p56
        $region22: #{tpu_custom_call.1} parent=19 // pred_check_branch
          %119 = sbr.rel (%p117) target = $region24
        $region23: #{tpu_custom_call.1} parent=19 // pred_region
          %s120 = sand.u32 %s46, 1
          %s121 = scalar_lea.sflag [#allocation3], %s120
          %s122 = sand.u32 %s46, 1
          %s123 = smul.addr %s122, 8
          %s124 = scalar_lea.vmem [#allocation6], %s123
          %126 = vsyncadd %s121, 0
          %s127 = smul.addr %s15, 2
          %s128 = smul.addr %s127, 4
          %s129 = scalar_lea.hbm %s1, %s128
          %s131 = sshll.u32 %s129, 4
          %s132 = int_to_ptr.hbm [resolvable:$true] %s131
          %s133 = sshll.u32 %s124, 4
          %s134 = int_to_ptr.vmem [resolvable:$true] %s133
          %136 = dma.hbm_to_vmem [thread:$0]  %s132, 128, %s134, %s121
        $region24: #{tpu_custom_call.1} parent=19 // pred_fallthru
          _
      $region20: #{tpu_custom_call.1} parent=5 // pred_fallthru
        _
      %p137 = scmp.le.s32.totalorder 1, %s15
      %p138 = scmp.lt.s32.totalorder %s15, 3
      %p139 = pnand %p137, %p138
      %p140 = pneg %p139
      // Predicated region
      $region25: #{tpu_custom_call.1} parent=5 // pred_check
        _
      $region26: #{tpu_custom_call.1} parent=5 // pred_check_branch
        %142 = sbr.rel (%p139) target = $region28
      $region27: #{tpu_custom_call.1} parent=5 // pred_region
        %s143 = ssub.s32 %s15, 1
        // Predicated region
        $region29: #{tpu_custom_call.1} parent=27 // pred_check
          %p144 = pneg %p36
        $region30: #{tpu_custom_call.1} parent=27 // pred_check_branch
          %146 = sbr.rel (%p144) target = $region32
        $region31: #{tpu_custom_call.1} parent=27 // pred_region
          %148 = dma.done [#allocation5], 16
        $region32: #{tpu_custom_call.1} parent=27 // pred_fallthru
          _
        %s149 = sand.u32 %s49, 1
        %s150 = scalar_lea.sflag [#allocation3], %s149
        %s151 = sand.u32 %s49, 1
        %s152 = smul.addr %s151, 8
        %s153 = scalar_lea.vmem [#allocation6], %s152
        // Predicated region
        $region33: #{tpu_custom_call.1} parent=27 // pred_check
          %p154 = pneg %p62
        $region34: #{tpu_custom_call.1} parent=27 // pred_check_branch
          %156 = sbr.rel (%p154) target = $region36
        $region35: #{tpu_custom_call.1} parent=27 // pred_region
          %158 = dma.done %s150, 128
        $region36: #{tpu_custom_call.1} parent=27 // pred_fallthru
          _
        %159 = sfence
        %p160 = pneg %p36
        %p161 = pneg %p33
        %s162 = sand.u32 %s49, 1
        %s163 = scalar_lea.sflag [#allocation3], %s162
        %s164 = sand.u32 %s49, 1
        %s165 = smul.addr %s164, 8
        %s166 = scalar_lea.vmem [#allocation6], %s165
        %p167 = pneg %p62
        %p168 = pneg %p59
        %p169 = pneg %p88
        %p170 = pneg %p85
        %s171 = sand.u32 %s75, 1
        %s172 = scalar_lea.sflag [#allocation4], %s171
        %s173 = sand.u32 %s75, 1
        %s174 = smul.addr %s173, 8
        %s175 = scalar_lea.vmem [#allocation7], %s174
        %v176 = vld [vmem:[%s153] sm:$0xff]
        %178 = vst [vmem:[#allocation1] ss:$2 sm:$0xff] %v176
        %v179 = vld.sshfl [vmem:[#allocation1] sm:$0xff pattern:$0x75316420]
        %v180 = vld.sshfl [vmem:[#allocation1 + $0x8] sm:$0xff pattern:$0x75316420]
        %vm183 = vcmask 1043456
        %v184 = vsel %vm183, %v179, 0.0
        %v185 = vsel %vm183, %v180, 0.0
        %v186 = vadd.f32 %v184, %v185
        %187 = vadd.xlane.f32.xlu0 %v186
        %v188 = vpop.xlane.xlu0 %187
        %v189 = vmul.f32 %v188, 0.00390625
        %s190 = sld [smem:[#allocation2]]
        %s191 = sld [smem:[#allocation2 + $0x1]]
        %s192 = sld [smem:[#allocation2 + $0x2]]
        %v194 = vrot.slane %v189, 7
        %vm196 = vcmask 1040384
        %v197 = vsel %vm196, 0.0, %v194
        %v198 = vrot.slane %v189, 1
        %vm200 = vcmask 1042432
        %v201 = vsel %vm200, %v198, 0.0
        %v202 = vstv %s190
        %v203 = vmul.f32 %v202, %v197
        %v204 = vstv %s191
        %v205 = vmul.f32 %v204, %v189
        %v206 = vadd.f32 %v203, %v205
        %v207 = vstv %s192
        %v208 = vmul.f32 %v207, %v201
        %v209 = vadd.f32 %v206, %v208
        %v210 = vxor.u32 %v209, 2147483648
        %v211 = vmul.f32 %v210, 1.442695
        %v212 = vpow.pop %v211
        %v213 = vadd.f32 %v212, 1.0
        %v214 = vrcp.pop %v213
        %v215 = vmul.f32 %v213, %v214
        %v216 = vsub.f32 1.0, %v215
        %v217 = vmul.f32 %v214, %v216
        %v218 = vadd.f32 %v214, %v217
        %vm219 = vweird.f32 %v213
        %vm220 = vweird.f32 %v214
        %vm221 = vmor %vm219, %vm220
        %v222 = vsel %vm221, %v214, %v218
        %v223 = vand.u32 2147483647, %v213
        %vm224 = vcmp.eq.f32.partialorder %v223, 8.507059e+37
        %v225 = vand.u32 %v213, 2147483648
        %v226 = vor.u32 1.1754944e-38, %v225
        %v227 = vsel %vm224, %v226, %v222
        %v228 = vmul.f32 1.0, %v227
        %230 = vset.pattern.permute.xlu0 0
        %231 = vperm.xlu0 %230, %v228
        %v232 = vpop.permute.xlu0 %231
        %v234 = vunpack.c.l.s4 839922192
        %v235 = vunpack.c.0.s8 %v234
        %v236 = vperm.slane %v232, %v235
        %v238 = vmul.f32 %v176, %v236
        %239 = vst [vmem:[%s175] sm:$0xff] %v238
        %s240 = sand.u32 %s75, 1
        %s241 = scalar_lea.sflag [#allocation4], %s240
        %s242 = sand.u32 %s75, 1
        %s243 = smul.addr %s242, 8
        %s244 = scalar_lea.vmem [#allocation7], %s243
        // Predicated region
        $region37: #{tpu_custom_call.1} parent=27 // pred_check
          %p245 = pneg %p85
        $region38: #{tpu_custom_call.1} parent=27 // pred_check_branch
          %247 = sbr.rel (%p245) target = $region40
        $region39: #{tpu_custom_call.1} parent=27 // pred_region
          %249 = vsyncadd %s241, 0
          %s250 = smul.addr %s20, 2
          %s251 = smul.addr %s250, 4
          %s252 = scalar_lea.hbm %s2, %s251
          %s254 = sshll.u32 %s244, 4
          %s255 = int_to_ptr.vmem [resolvable:$true] %s254
          %s256 = sshll.u32 %s252, 4
          %s257 = int_to_ptr.hbm [resolvable:$true] %s256
          %259 = dma.vmem_to_hbm [thread:$0]  %s255, 128, %s257, %s241
        $region40: #{tpu_custom_call.1} parent=27 // pred_fallthru
          _
      $region28: #{tpu_custom_call.1} parent=5 // pred_fallthru
        _
      %p260 = scmp.le.s32.totalorder 2, %s15
      // Predicated region
      $region41: #{tpu_custom_call.1} parent=5 // pred_check
        %p261 = pneg %p260
      $region42: #{tpu_custom_call.1} parent=5 // pred_check_branch
        %263 = sbr.rel (%p261) target = $region44
      $region43: #{tpu_custom_call.1} parent=5 // pred_region
        %s264 = ssub.s32 %s15, 2
        // Predicated region
        $region45: #{tpu_custom_call.1} parent=43 // pred_check
          %p265 = pneg %p91
        $region46: #{tpu_custom_call.1} parent=43 // pred_check_branch
          %267 = sbr.rel (%p265) target = $region48
        $region47: #{tpu_custom_call.1} parent=43 // pred_region
          %s268 = sand.u32 %s76, 1
          %s269 = scalar_lea.sflag [#allocation4], %s268
          %s270 = sand.u32 %s76, 1
          %s271 = smul.addr %s270, 8
          %s272 = scalar_lea.vmem [#allocation7], %s271
          %274 = dma.done %s269, 128
        $region48: #{tpu_custom_call.1} parent=43 // pred_fallthru
          _
      $region44: #{tpu_custom_call.1} parent=5 // pred_fallthru
        _
    $region6: #{tpu_custom_call.1} parent=1 // loop_footer
      %s19 = sadd.s32 1, %s15
    $region7: #{tpu_custom_call.1} parent=1 // loop_footer_branch
      %14 = sbr.rel target = $region3
    $region8: #{tpu_custom_call.1} parent=1 // loop_exit
      _
    %275 = vsyncpa [#allocation3], 1
    %s276 = scalar_lea.sflag [#allocation3], 1
    %277 = vsyncpa %s276, 1
    %278 = vsyncpa [#allocation4], 1
    %s279 = scalar_lea.sflag [#allocation4], 1
    %280 = vsyncpa %s279, 1
    %281 = vsyncpa [#allocation5], 1
    %s282 = scalar_lea.sflag [#allocation5], 1
    %283 = vsyncpa %s282, 1

</llo_original>
